<compile_context>
chip_gen: v7x
topology: tpu7x:2x2x1
jax: 0.10.0
libtpu: 0.0.40
codegen_flags: <defaults>
</compile_context>

<pallas_src>
import functools

import jax
import jax.numpy as jnp
from jax import lax
from jax.experimental import pallas as pl
from jax.experimental.pallas import tpu as pltpu


def _round_up(n, m):
    return ((n + m - 1) // m) * m


def head_kernel(x_ref, wq_ref, wk_ref, wv_ref, o_ref,
                k_sc, v_sc, m_sc, l_sc, acc_sc, *,
                scale, seq_len, tq):
    # x_ref : (Tp, C)  full (padded) sequence for this batch element (DMA'd once / batch)
    # w*_ref: (C, D)   projection weights (VMEM resident)
    # o_ref : (tq, D)  output tile for query tile i
    # k_sc/v_sc: (Tp, D) per-batch persistent K / V projections
    # m_sc/l_sc/acc_sc: flash-softmax running state (f32)
    i = pl.program_id(1)

    # --- K / V projection: once per batch element, reused by every query tile.
    @pl.when(i == 0)
    def _():
        xs = x_ref[...]
        k_sc[...] = jnp.dot(xs, wk_ref[...],
                            preferred_element_type=jnp.float32).astype(k_sc.dtype)
        v_sc[...] = jnp.dot(xs, wv_ref[...],
                            preferred_element_type=jnp.float32).astype(v_sc.dtype)

    # --- Q projection for this query tile, sliced from the resident x block.
    q_start = pl.multiple_of(i * tq, tq)
    xq = x_ref[pl.ds(q_start, tq), :]                                  # (tq, C)
    q = jnp.dot(xq, wq_ref[...], preferred_element_type=jnp.float32) * scale
    q = q.astype(k_sc.dtype)                                           # MXU operand dtype

    # --- init flash accumulators (re-initialized every query tile).
    m_sc[...] = jnp.full(m_sc.shape, -jnp.inf, m_sc.dtype)
    l_sc[...] = jnp.zeros(l_sc.shape, l_sc.dtype)
    acc_sc[...] = jnp.zeros(acc_sc.shape, acc_sc.dtype)

    # --- online-softmax loop over key tiles; causality => only tiles 0..i.
    @pl.loop(0, i + 1)
    def _(j):
        k_start = pl.multiple_of(j * tq, tq)
        kj = k_sc[pl.ds(k_start, tq), :]                               # (tq, D)
        vj = v_sc[pl.ds(k_start, tq), :]                               # (tq, D)

        s = lax.dot_general(q, kj, (((1,), (1,)), ((), ())),
                            preferred_element_type=jnp.float32)        # (tq, tq)

        row = i * tq + lax.broadcasted_iota(jnp.int32, s.shape, 0)
        col = j * tq + lax.broadcasted_iota(jnp.int32, s.shape, 1)
        s = jnp.where(jnp.logical_and(col <= row, col < seq_len), s, -jnp.inf)

        m_prev = m_sc[...]
        m_new = jnp.maximum(m_prev, jnp.max(s, axis=-1, keepdims=True))
        alpha = jnp.exp(m_prev - m_new)
        p = jnp.exp(s - m_new)
        l_sc[...] = alpha * l_sc[...] + jnp.sum(p, axis=-1, keepdims=True)
        acc_sc[...] = alpha * acc_sc[...] + jnp.dot(p.astype(vj.dtype), vj,
                                                    preferred_element_type=jnp.float32)
        m_sc[...] = m_new

    # --- deferred normalization (EUP reciprocal in a free slot) + store.
    o_ref[...] = (acc_sc[...] * pl.reciprocal(l_sc[...], approx=True)).astype(o_ref.dtype)
    # TODO(synk): nn.Dropout on attention weights omitted (eval-mode identity);
    # a training path would use pltpu.prng_seed + pltpu.prng_random_bits.
    # TODO(synk): for lane-dense (>=128) output stores, fuse all heads into one
    # kernel (n_heads*D wide output) — out of scope for this single-Head module.


@functools.partial(jax.jit, static_argnames=("block_q",))
def head_forward(x, wq, wk, wv, *, block_q=128):
    """x: (B, T, C). wq/wk/wv: (C, head_size) = transposed PyTorch Linear weights.
    Returns (B, T, head_size).  block_q=128 is safe everywhere; 256 better fills
    the 256-wide MXU on v6e/v7x for long sequences."""
    B, T, C = x.shape
    D = wq.shape[1]
    scale = float(D) ** -0.5

    itemsize = jnp.dtype(x.dtype).itemsize
    sub = {4: 8, 2: 16, 1: 32}.get(itemsize, 8)          # sublane packing per dtype
    tq = min(block_q, _round_up(T, sub))
    Tp = _round_up(T, tq)
    x_p = jnp.pad(x, ((0, 0), (0, Tp - T), (0, 0))) if Tp != T else x
    n_q = Tp // tq
    grid = (B, n_q)

    # VMEM budget: resident x block (double-buffered) + weights + out tile
    # + K/V scratch + f32 flash state + (tq, tq) score intermediates; 2x headroom,
    # capped at 48 MiB to leave room for compiler scratch on v7x (64 MiB physical).
    buf_bytes = itemsize * (2 * Tp * C + 2 * 3 * C * D + 2 * tq * D)
    scratch_bytes = itemsize * 2 * Tp * D + 4 * tq * (D + 2)
    interm_bytes = 4 * 4 * tq * tq
    vmem_limit = int(min(48 * 1024 * 1024,
                         max(2 * (buf_bytes + scratch_bytes + interm_bytes),
                             4 * 1024 * 1024)))

    flops = int(B * (6 * Tp * C * D + 2 * Tp * (Tp + tq) * D))
    cost = pl.CostEstimate(
        flops=flops,
        transcendentals=int(B * Tp * (Tp + tq) // 2),
        bytes_accessed=int(itemsize * (B * Tp * C + 3 * C * D + B * Tp * D)),
    )

    kernel = functools.partial(head_kernel, scale=scale, seq_len=T, tq=tq)

    out = pl.pallas_call(
        kernel,
        out_shape=jax.ShapeDtypeStruct((B, Tp, D), x.dtype),
        grid=grid,
        in_specs=[
            # full (padded) sequence; constant block per batch => DMA'd once per batch
            pl.BlockSpec((None, Tp, C), lambda b, i: (b, 0, 0)),
            pl.BlockSpec((C, D), lambda b, i: (0, 0)),   # Wq (VMEM resident)
            pl.BlockSpec((C, D), lambda b, i: (0, 0)),   # Wk
            pl.BlockSpec((C, D), lambda b, i: (0, 0)),   # Wv
        ],
        out_specs=pl.BlockSpec((None, tq, D), lambda b, i: (b, i, 0)),
        scratch_shapes=[
            pltpu.VMEM((Tp, D), x.dtype),        # K (per-batch persistent)
            pltpu.VMEM((Tp, D), x.dtype),        # V (per-batch persistent)
            pltpu.VMEM((tq, 1), jnp.float32),    # running max
            pltpu.VMEM((tq, 1), jnp.float32),    # running sum
            pltpu.VMEM((tq, D), jnp.float32),    # output accumulator
        ],
        compiler_params=pltpu.CompilerParams(
            dimension_semantics=("parallel", "arbitrary"),
            vmem_limit_bytes=vmem_limit),
        cost_estimate=cost,
    )(x_p, wq, wk, wv)

    return out[:, :T, :]


def init_params(key, n_embed, head_size, dtype=jnp.float32):
    """PyTorch Linear weight is (out, in); we store the transpose (in, out) so
    the kernel computes x @ W directly. bias=False as in the module."""
    kq, kk, kv = jax.random.split(key, 3)
    bound = 1.0 / (n_embed ** 0.5)
    wq = jax.random.uniform(kq, (n_embed, head_size), dtype, -bound, bound)
    wk = jax.random.uniform(kk, (n_embed, head_size), dtype, -bound, bound)
    wv = jax.random.uniform(kv, (n_embed, head_size), dtype, -bound, bound)
    return wq, wk, wv


if __name__ == "__main__":
    B, T, n_embed, head_size = 2, 8, 32, 16    # small shapes: batch=2, seq=8, hidden=32
    key = jax.random.PRNGKey(0)
    kx, kp = jax.random.split(key)
    x = jax.random.normal(kx, (B, T, n_embed), jnp.float32)
    wq, wk, wv = init_params(kp, n_embed, head_size)

    out = head_forward(x, wq, wk, wv)
    out = jax.block_until_ready(out)

    # Pure-JAX reference (dropout is identity in eval mode).
    q = x @ wq
    k = x @ wk
    v = x @ wv
    s = (q @ jnp.swapaxes(k, -1, -2)) * (head_size ** -0.5)
    tril = jnp.tril(jnp.ones((T, T), bool))
    s = jnp.where(tril[None], s, -jnp.inf)
    p = jax.nn.softmax(s, axis=-1)
    ref = p @ v

    assert out.shape == (B, T, head_size)
    # Slightly looser than 1e-3: online softmax + approx EUP reciprocal.
    assert jnp.allclose(out, ref, atol=2e-3, rtol=2e-3), float(jnp.max(jnp.abs(out - ref)))

    print("KERNEL_OK")
</pallas_src>

<mosaic_0001>
module attributes {stable_mosaic.version = 11 : i64} {
  func.func @head_kernel(%arg0: i32, %arg1: i32, %arg2: memref<1x8x32xf32, #tpu.memory_space<vmem>>, %arg3: memref<32x16xf32, #tpu.memory_space<vmem>>, %arg4: memref<32x16xf32, #tpu.memory_space<vmem>>, %arg5: memref<32x16xf32, #tpu.memory_space<vmem>>, %arg6: memref<1x8x16xf32, #tpu.memory_space<vmem>>, %arg7: memref<8x16xf32, #tpu.memory_space<vmem>>, %arg8: memref<8x16xf32, #tpu.memory_space<vmem>>, %arg9: memref<8x1xf32, #tpu.memory_space<vmem>>, %arg10: memref<8x1xf32, #tpu.memory_space<vmem>>, %arg11: memref<8x16xf32, #tpu.memory_space<vmem>>) attributes {dimension_semantics = [#tpu.dimension_semantics<parallel>, #tpu.dimension_semantics<arbitrary>], iteration_bounds = array<i64: 2, 1>, scalar_prefetch = 0 : i64, scratch_operands = 5 : i64, tpu.core_type = #tpu.core_type<tc>, window_params = [{transform_indices = @transform_0, window_bounds = array<i64: 1, 8, 32>}, {pipeline_mode = #tpu.pipeline_mode<synchronous>, transform_indices = @transform_1, window_bounds = array<i64: 32, 16>}, {pipeline_mode = #tpu.pipeline_mode<synchronous>, transform_indices = @transform_2, window_bounds = array<i64: 32, 16>}, {pipeline_mode = #tpu.pipeline_mode<synchronous>, transform_indices = @transform_3, window_bounds = array<i64: 32, 16>}, {transform_indices = @transform_4, window_bounds = array<i64: 1, 8, 16>}]} {
    %c0_i32 = arith.constant 0 : i32
    %0 = arith.cmpi eq, %arg1, %c0_i32 : i32
    %1 = arith.extui %0 : i1 to i32
    %c0_i32_0 = arith.constant 0 : i32
    %2 = arith.cmpi ne, %1, %c0_i32_0 : i32
    scf.if %2 {
      %c0_29 = arith.constant 0 : index
      %c0_30 = arith.constant 0 : index
      %c0_31 = arith.constant 0 : index
      %33 = vector.load %arg2[%c0_29, %c0_30, %c0_31] : memref<1x8x32xf32, #tpu.memory_space<vmem>>, vector<1x8x32xf32>
      %34 = vector.shape_cast %33 : vector<1x8x32xf32> to vector<8x32xf32>
      %c0_32 = arith.constant 0 : index
      %c0_33 = arith.constant 0 : index
      %35 = vector.load %arg4[%c0_32, %c0_33] : memref<32x16xf32, #tpu.memory_space<vmem>>, vector<32x16xf32>
      %cst_34 = arith.constant dense<0.000000e+00> : vector<8x16xf32>
      %36 = tpu.matmul %34, %35, %cst_34 {dimension_numbers = #tpu.dot_dimension_numbers<[1], [0], [0], [1], [0, 0, 1, 1], [], []>} : vector<8x32xf32>, vector<32x16xf32>, vector<8x16xf32> -> vector<8x16xf32>
      %c0_35 = arith.constant 0 : index
      %c0_36 = arith.constant 0 : index
      %37 = vector.load %arg7[%c0_35, %c0_36] : memref<8x16xf32, #tpu.memory_space<vmem>>, vector<8x16xf32>
      tpu.vector_store %arg7[%c0_35, %c0_36], %36 {strides = array<i32>} : memref<8x16xf32, #tpu.memory_space<vmem>>, vector<8x16xf32>,
      %c0_37 = arith.constant 0 : index
      %c0_38 = arith.constant 0 : index
      %38 = vector.load %arg5[%c0_37, %c0_38] : memref<32x16xf32, #tpu.memory_space<vmem>>, vector<32x16xf32>
      %cst_39 = arith.constant dense<0.000000e+00> : vector<8x16xf32>
      %39 = tpu.matmul %34, %38, %cst_39 {dimension_numbers = #tpu.dot_dimension_numbers<[1], [0], [0], [1], [0, 0, 1, 1], [], []>} : vector<8x32xf32>, vector<32x16xf32>, vector<8x16xf32> -> vector<8x16xf32>
      %c0_40 = arith.constant 0 : index
      %c0_41 = arith.constant 0 : index
      %40 = vector.load %arg8[%c0_40, %c0_41] : memref<8x16xf32, #tpu.memory_space<vmem>>, vector<8x16xf32>
      tpu.vector_store %arg8[%c0_40, %c0_41], %39 {strides = array<i32>} : memref<8x16xf32, #tpu.memory_space<vmem>>, vector<8x16xf32>,
    } else {
    }
    %c8_i32 = arith.constant 8 : i32
    %3 = arith.muli %arg1, %c8_i32 : i32
    %4 = tpu.assume_multiple %3, 8 : i32
    %c0 = arith.constant 0 : index
    %5 = arith.index_cast %4 : i32 to index
    %c0_1 = arith.constant 0 : index
    %6 = vector.load %arg2[%c0, %5, %c0_1] : memref<1x8x32xf32, #tpu.memory_space<vmem>>, vector<1x8x32xf32>
    %7 = vector.shape_cast %6 : vector<1x8x32xf32> to vector<8x32xf32>
    %c0_2 = arith.constant 0 : index
    %c0_3 = arith.constant 0 : index
    %8 = vector.load %arg3[%c0_2, %c0_3] : memref<32x16xf32, #tpu.memory_space<vmem>>, vector<32x16xf32>
    %cst = arith.constant dense<0.000000e+00> : vector<8x16xf32>
    %9 = tpu.matmul %7, %8, %cst {dimension_numbers = #tpu.dot_dimension_numbers<[1], [0], [0], [1], [0, 0, 1, 1], [], []>} : vector<8x32xf32>, vector<32x16xf32>, vector<8x16xf32> -> vector<8x16xf32>
    %cst_4 = arith.constant 2.500000e-01 : f32
    %10 = vector.broadcast %cst_4 : f32 to vector<8x16xf32>
    %11 = arith.mulf %9, %10 : vector<8x16xf32>
    %cst_5 = arith.constant 0xFF800000 : f32
    %12 = vector.broadcast %cst_5 : f32 to vector<8x1xf32>
    %c0_6 = arith.constant 0 : index
    %c0_7 = arith.constant 0 : index
    %13 = vector.load %arg9[%c0_6, %c0_7] : memref<8x1xf32, #tpu.memory_space<vmem>>, vector<8x1xf32>
    tpu.vector_store %arg9[%c0_6, %c0_7], %12 {strides = array<i32>} : memref<8x1xf32, #tpu.memory_space<vmem>>, vector<8x1xf32>,
    %cst_8 = arith.constant 0.000000e+00 : f32
    %14 = vector.broadcast %cst_8 : f32 to vector<8x1xf32>
    %c0_9 = arith.constant 0 : index
    %c0_10 = arith.constant 0 : index
    %15 = vector.load %arg10[%c0_9, %c0_10] : memref<8x1xf32, #tpu.memory_space<vmem>>, vector<8x1xf32>
    tpu.vector_store %arg10[%c0_9, %c0_10], %14 {strides = array<i32>} : memref<8x1xf32, #tpu.memory_space<vmem>>, vector<8x1xf32>,
    %cst_11 = arith.constant 0.000000e+00 : f32
    %16 = vector.broadcast %cst_11 : f32 to vector<8x16xf32>
    %c0_12 = arith.constant 0 : index
    %c0_13 = arith.constant 0 : index
    %17 = vector.load %arg11[%c0_12, %c0_13] : memref<8x16xf32, #tpu.memory_space<vmem>>, vector<8x16xf32>
    tpu.vector_store %arg11[%c0_12, %c0_13], %16 {strides = array<i32>} : memref<8x16xf32, #tpu.memory_space<vmem>>, vector<8x16xf32>,
    %c1_i32 = arith.constant 1 : i32
    %18 = arith.addi %arg1, %c1_i32 : i32
    %c0_i32_14 = arith.constant 0 : i32
    %19 = arith.subi %18, %c0_i32_14 : i32
    %c1_i32_15 = arith.constant 1 : i32
    %c1_i32_16 = arith.constant 1 : i32
    %20 = arith.subi %c1_i32_15, %c1_i32_16 : i32
    %21 = arith.addi %19, %20 : i32
    %c1_i32_17 = arith.constant 1 : i32
    %22 = arith.divsi %21, %c1_i32_17 : i32
    %c1_i32_18 = arith.constant 1 : i32
    %c0_i32_19 = arith.constant 0 : i32
    %c0_i32_20 = arith.constant 0 : i32
    %23 = arith.subi %22, %c0_i32_20 : i32
    %24 = arith.addi %c0_i32_20, %23 : i32
    %c1_i32_21 = arith.constant 1 : i32
    scf.for %arg12 = %c0_i32_20 to %24 step %c1_i32_21  : i32 {
      %33 = arith.muli %arg12, %c1_i32_18 : i32
      %34 = arith.addi %c0_i32_19, %33 : i32
      %c8_i32_29 = arith.constant 8 : i32
      %35 = arith.muli %34, %c8_i32_29 : i32
      %36 = tpu.assume_multiple %35, 8 : i32
      %37 = arith.index_cast %36 : i32 to index
      %c0_30 = arith.constant 0 : index
      %38 = vector.load %arg7[%37, %c0_30] : memref<8x16xf32, #tpu.memory_space<vmem>>, vector<8x16xf32>
      %39 = arith.index_cast %36 : i32 to index
      %c0_31 = arith.constant 0 : index
      %40 = vector.load %arg8[%39, %c0_31] : memref<8x16xf32, #tpu.memory_space<vmem>>, vector<8x16xf32>
      %cst_32 = arith.constant dense<0.000000e+00> : vector<8x8xf32>
      %41 = tpu.matmul %11, %38, %cst_32 {dimension_numbers = #tpu.dot_dimension_numbers<[1], [1], [0], [0], [0, 0, 1, 0], [], []>} : vector<8x16xf32>, vector<8x16xf32>, vector<8x8xf32> -> vector<8x8xf32>
      %c8_i32_33 = arith.constant 8 : i32
      %42 = arith.muli %arg1, %c8_i32_33 : i32
      %43 = tpu.iota {dimensions = array<i32: 0>} : vector<8x8xi32>
      %44 = vector.broadcast %42 : i32 to vector<8x8xi32>
      %45 = arith.addi %44, %43 : vector<8x8xi32>
      %c8_i32_34 = arith.constant 8 : i32
      %46 = arith.muli %34, %c8_i32_34 : i32
      %47 = tpu.iota {dimensions = array<i32: 1>} : vector<8x8xi32>
      %48 = vector.broadcast %46 : i32 to vector<8x8xi32>
      %49 = arith.addi %48, %47 : vector<8x8xi32>
      %50 = arith.cmpi sle, %49, %45 : vector<8x8xi32>
      %c8_i32_35 = arith.constant 8 : i32
      %51 = vector.broadcast %c8_i32_35 : i32 to vector<8x8xi32>
      %52 = arith.cmpi slt, %49, %51 : vector<8x8xi32>
      %53 = arith.andi %50, %52 : vector<8x8xi1>
      %cst_36 = arith.constant 0xFF800000 : f32
      %54 = vector.broadcast %cst_36 : f32 to vector<8x8xf32>
      %55 = arith.select %53, %41, %54 : vector<8x8xi1>, vector<8x8xf32>
      %c0_37 = arith.constant 0 : index
      %c0_38 = arith.constant 0 : index
      %56 = vector.load %arg9[%c0_37, %c0_38] : memref<8x1xf32, #tpu.memory_space<vmem>>, vector<8x1xf32>
      %cst_39 = arith.constant dense<0xFF800000> : vector<8xf32>
      %57 = vector.multi_reduction <maximumf>, %55, %cst_39 [1] : vector<8x8xf32> to vector<8xf32>
      %58 = vector.shape_cast %57 : vector<8xf32> to vector<8x1xf32>
      %59 = arith.maximumf %56, %58 : vector<8x1xf32>
      %60 = arith.subf %56, %59 : vector<8x1xf32>
      %61 = math.exp %60 : vector<8x1xf32>
      %62 = vector.broadcast %59 : vector<8x1xf32> to vector<8x8xf32>
      %63 = arith.subf %55, %62 : vector<8x8xf32>
      %64 = math.exp %63 : vector<8x8xf32>
      %c0_40 = arith.constant 0 : index
      %c0_41 = arith.constant 0 : index
      %65 = vector.load %arg10[%c0_40, %c0_41] : memref<8x1xf32, #tpu.memory_space<vmem>>, vector<8x1xf32>
      %66 = arith.mulf %61, %65 : vector<8x1xf32>
      %cst_42 = arith.constant dense<0.000000e+00> : vector<8xf32>
      %67 = vector.multi_reduction <add>, %64, %cst_42 [1] : vector<8x8xf32> to vector<8xf32>
      %68 = vector.shape_cast %67 : vector<8xf32> to vector<8x1xf32>
      %69 = arith.addf %66, %68 : vector<8x1xf32>
      %c0_43 = arith.constant 0 : index
      %c0_44 = arith.constant 0 : index
      %70 = vector.load %arg10[%c0_43, %c0_44] : memref<8x1xf32, #tpu.memory_space<vmem>>, vector<8x1xf32>
      tpu.vector_store %arg10[%c0_43, %c0_44], %69 {strides = array<i32>} : memref<8x1xf32, #tpu.memory_space<vmem>>, vector<8x1xf32>,
      %c0_45 = arith.constant 0 : index
      %c0_46 = arith.constant 0 : index
      %71 = vector.load %arg11[%c0_45, %c0_46] : memref<8x16xf32, #tpu.memory_space<vmem>>, vector<8x16xf32>
      %72 = vector.broadcast %61 : vector<8x1xf32> to vector<8x16xf32>
      %73 = arith.mulf %72, %71 : vector<8x16xf32>
      %cst_47 = arith.constant dense<0.000000e+00> : vector<8x16xf32>
      %74 = tpu.matmul %64, %40, %cst_47 {dimension_numbers = #tpu.dot_dimension_numbers<[1], [0], [0], [1], [0, 0, 1, 1], [], []>} : vector<8x8xf32>, vector<8x16xf32>, vector<8x16xf32> -> vector<8x16xf32>
      %75 = arith.addf %73, %74 : vector<8x16xf32>
      %c0_48 = arith.constant 0 : index
      %c0_49 = arith.constant 0 : index
      %76 = vector.load %arg11[%c0_48, %c0_49] : memref<8x16xf32, #tpu.memory_space<vmem>>, vector<8x16xf32>
      tpu.vector_store %arg11[%c0_48, %c0_49], %75 {strides = array<i32>} : memref<8x16xf32, #tpu.memory_space<vmem>>, vector<8x16xf32>,
      %c0_50 = arith.constant 0 : index
      %c0_51 = arith.constant 0 : index
      %77 = vector.load %arg9[%c0_50, %c0_51] : memref<8x1xf32, #tpu.memory_space<vmem>>, vector<8x1xf32>
      tpu.vector_store %arg9[%c0_50, %c0_51], %59 {strides = array<i32>} : memref<8x1xf32, #tpu.memory_space<vmem>>, vector<8x1xf32>,
    }
    %c0_22 = arith.constant 0 : index
    %c0_23 = arith.constant 0 : index
    %25 = vector.load %arg11[%c0_22, %c0_23] : memref<8x16xf32, #tpu.memory_space<vmem>>, vector<8x16xf32>
    %c0_24 = arith.constant 0 : index
    %c0_25 = arith.constant 0 : index
    %26 = vector.load %arg10[%c0_24, %c0_25] : memref<8x1xf32, #tpu.memory_space<vmem>>, vector<8x1xf32>
    %27 = tpu.reciprocal %26 {approx = true} : vector<8x1xf32> -> vector<8x1xf32>
    %28 = vector.broadcast %27 : vector<8x1xf32> to vector<8x16xf32>
    %29 = arith.mulf %25, %28 : vector<8x16xf32>
    %c0_26 = arith.constant 0 : index
    %c0_27 = arith.constant 0 : index
    %c0_28 = arith.constant 0 : index
    %30 = vector.load %arg6[%c0_26, %c0_27, %c0_28] : memref<1x8x16xf32, #tpu.memory_space<vmem>>, vector<1x8x16xf32>
    %31 = vector.shape_cast %30 : vector<1x8x16xf32> to vector<8x16xf32>
    %32 = vector.shape_cast %29 : vector<8x16xf32> to vector<1x8x16xf32>
    tpu.vector_store %arg6[%c0_26, %c0_27, %c0_28], %32 {strides = array<i32>} : memref<1x8x16xf32, #tpu.memory_space<vmem>>, vector<1x8x16xf32>,
    return
  }
  func.func @transform_0(%arg0: i32, %arg1: i32) -> (i32, i32, i32) {
    %c0_i32 = arith.constant 0 : i32
    %c0_i32_0 = arith.constant 0 : i32
    %c0_i32_1 = arith.constant 0 : i32
    return %arg0, %c0_i32, %c0_i32_0 : i32, i32, i32
  }
  func.func @transform_1(%arg0: i32, %arg1: i32) -> (i32, i32) {
    %c0_i32 = arith.constant 0 : i32
    %c0_i32_0 = arith.constant 0 : i32
    %c0_i32_1 = arith.constant 0 : i32
    return %c0_i32, %c0_i32_0 : i32, i32
  }
  func.func @transform_2(%arg0: i32, %arg1: i32) -> (i32, i32) {
    %c0_i32 = arith.constant 0 : i32
    %c0_i32_0 = arith.constant 0 : i32
    %c0_i32_1 = arith.constant 0 : i32
    return %c0_i32, %c0_i32_0 : i32, i32
  }
  func.func @transform_3(%arg0: i32, %arg1: i32) -> (i32, i32) {
    %c0_i32 = arith.constant 0 : i32
    %c0_i32_0 = arith.constant 0 : i32
    %c0_i32_1 = arith.constant 0 : i32
    return %c0_i32, %c0_i32_0 : i32, i32
  }
  func.func @transform_4(%arg0: i32, %arg1: i32) -> (i32, i32, i32) {
    %c0_i32 = arith.constant 0 : i32
    %c0_i32_0 = arith.constant 0 : i32
    return %arg0, %arg1, %c0_i32 : i32, i32, i32
  }
}

</mosaic_0001>

<llo_original>
// kernel: head_forward.1
$region0: #{head_forward.1}
  #allocation0 [shape = 'u32[]', space=smem, size = 0x4, offset = 0x4, fixed_abs, tag = 'smem constant byte address 0x4 - core index']
  #allocation1 [shape = 'u32[144,128]{1,0:T(1,128)}', space=vmem, size = 0x12000, scoped, tag = 'internal scratch']
  #allocation2 [shape = 'f32[8,16]{1,0:T(8,128)}', space=vmem, size = 0x1000, scoped, tag = 'scratch operand']
  #allocation3 [shape = 'f32[8,16]{1,0:T(8,128)}', space=vmem, size = 0x1000, scoped, tag = 'scratch operand']
  #allocation4 [shape = 'f32[8,1]{1,0:T(8,128)}', space=vmem, size = 0x1000, scoped, tag = 'scratch operand']
  #allocation5 [shape = 'f32[8,1]{1,0:T(8,128)}', space=vmem, size = 0x1000, scoped, tag = 'scratch operand']
  #allocation6 [shape = 'f32[8,16]{1,0:T(8,128)}', space=vmem, size = 0x1000, scoped, tag = 'scratch operand']
  %s0 = inlined_call_operand.vmem [shape: f32[2,8,32], index: 0, kind: input, shape index: {}]
  %s1 = inlined_call_operand.vmem [shape: f32[32,16], index: 1, kind: input, shape index: {}]
  %s2 = inlined_call_operand.vmem [shape: f32[32,16], index: 2, kind: input, shape index: {}]
  %s3 = inlined_call_operand.vmem [shape: f32[32,16], index: 3, kind: input, shape index: {}]
  %s4 = inlined_call_operand.hbm [shape: f32[2,8,16], index: 4, kind: output, shape index: {}]
  %s5 = sld [smem:[#allocation0]]
  $region60: #{head_forward.1} parent=0
    _
  %s7 = ssub.s32 1, %s5
  %s8 = scalar_select 0, %s7, %s5
  $region1: #{head_forward.1} parent=0
    #allocation7 [shape = 'u8[8192]{0}', space=vmem, size = 0x2000, scoped, tag = 'output window, operand 0']
    #allocation8 [shape = 's32[2]{0}', space=sflag, size = 0x8, scoped, tag = 'scoped memory for head_forward.1']
    %9 = vsyncpa [#allocation8], 0
    %s10 = scalar_lea.sflag [#allocation8], 1
    %11 = vsyncpa %s10, 0
    loop: start=0, step=1, limit=4
    $region2: #{head_forward.1} parent=1 // loop_pre_header
      _
    $region3: #{head_forward.1} parent=1 // loop_header
      %s13 = sphi 0, %s17
      %p14 = scmp.ge.s32.totalorder %s13, 4
      %s20 = sphi 0, %s32
      %s21 = sphi 0, %s28
      %s22 = sphi 0, %s20
      %s23 = sphi 0, %s21
      %s24 = sphi 0, %s22
      %s25 = sphi 0, %s23
      %s35 = sphi 0, %s37
      %s38 = sphi 0, %s35
      %s39 = sphi 0, %s38
      %s55 = sphi 0, %s39
      %s59 = sphi 0, %s59
      %s61 = sphi 0, %s59
      %s62 = sphi 0, %s61
      %s76 = sphi 0, %s62
      %s80 = sphi 0, %s80
      %s82 = sphi 0, %s80
      %s83 = sphi 0, %s82
      %s97 = sphi 0, %s83
      %s101 = sphi 0, %s101
      %s103 = sphi 0, %s101
      %s104 = sphi 0, %s103
      %s118 = sphi 0, %s104
      %s126 = sphi 0, %s128
      %s129 = sphi 0, %s126
      %s130 = sphi 0, %s129
      %s146 = sphi 0, %s130
    $region4: #{head_forward.1} parent=1 // loop_header_branch
      %16 = sbr.rel (%p14) target = $region8
    $region5: #{head_forward.1} parent=1 // loop_body
      %s18 = ssub.s32 %s13, 1
      %s19 = ssub.s32 %s13, 2
      %s26 = sadd.s32 1, %s21
      %p27 = scmp.ge.s32.totalorder %s26, 1
      %s28 = scalar_select %p27, 0, %s26
      %s29 = sadd.s32 1, %s20
      %s30 = scalar_select %p27, %s29, %s20
      %p31 = scmp.ge.s32.totalorder %s30, 2
      %s32 = scalar_select %p31, 0, %s30
      %s33 = ssub.s32 %s20, %s32
      %p34 = scmp.eq.s32.totalorder %s33, 0
      %s36 = sadd.s32 %s35, 1
      %s37 = scalar_select %p34, %s35, %s36
      %p40 = pneg %p34
      %p41 = scmp.eq.s32.totalorder %s13, 1
      %p42 = por %p40, %p41
      %p43 = scmp.ne.s32.totalorder %s35, %s38
      %p44 = scmp.eq.s32.totalorder %s13, 0
      %p45 = por %p43, %p44
      %p46 = scmp.ne.s32.totalorder %s35, %s38
      %p47 = scmp.eq.s32.totalorder %s18, 1
      %p48 = por %p46, %p47
      %p49 = scmp.ne.s32.totalorder %s38, %s39
      %p50 = scmp.eq.s32.totalorder %s18, 0
      %p51 = por %p49, %p50
      %p52 = scmp.ne.s32.totalorder %s38, %s39
      %p53 = scmp.eq.s32.totalorder %s19, 1
      %p54 = por %p52, %p53
      %p56 = scmp.ne.s32.totalorder %s39, %s55
      %p57 = scmp.eq.s32.totalorder %s19, 0
      %p58 = por %p56, %p57
      %s60 = sadd.s32 %s59, 1
      %p63 = scmp.eq.s32.totalorder %s13, 1
      %p64 = scmp.ne.s32.totalorder %s59, %s61
      %p65 = scmp.eq.s32.totalorder %s13, 0
      %p66 = por %p64, %p65
      %p67 = scmp.ne.s32.totalorder %s59, %s61
      %p68 = scmp.eq.s32.totalorder %s18, 1
      %p69 = por %p67, %p68
      %p70 = scmp.ne.s32.totalorder %s61, %s62
      %p71 = scmp.eq.s32.totalorder %s18, 0
      %p72 = por %p70, %p71
      %p73 = scmp.ne.s32.totalorder %s61, %s62
      %p74 = scmp.eq.s32.totalorder %s19, 1
      %p75 = por %p73, %p74
      %p77 = scmp.ne.s32.totalorder %s62, %s76
      %p78 = scmp.eq.s32.totalorder %s19, 0
      %p79 = por %p77, %p78
      %s81 = sadd.s32 %s80, 1
      %p84 = scmp.eq.s32.totalorder %s13, 1
      %p85 = scmp.ne.s32.totalorder %s80, %s82
      %p86 = scmp.eq.s32.totalorder %s13, 0
      %p87 = por %p85, %p86
      %p88 = scmp.ne.s32.totalorder %s80, %s82
      %p89 = scmp.eq.s32.totalorder %s18, 1
      %p90 = por %p88, %p89
      %p91 = scmp.ne.s32.totalorder %s82, %s83
      %p92 = scmp.eq.s32.totalorder %s18, 0
      %p93 = por %p91, %p92
      %p94 = scmp.ne.s32.totalorder %s82, %s83
      %p95 = scmp.eq.s32.totalorder %s19, 1
      %p96 = por %p94, %p95
      %p98 = scmp.ne.s32.totalorder %s83, %s97
      %p99 = scmp.eq.s32.totalorder %s19, 0
      %p100 = por %p98, %p99
      %s102 = sadd.s32 %s101, 1
      %p105 = scmp.eq.s32.totalorder %s13, 1
      %p106 = scmp.ne.s32.totalorder %s101, %s103
      %p107 = scmp.eq.s32.totalorder %s13, 0
      %p108 = por %p106, %p107
      %p109 = scmp.ne.s32.totalorder %s101, %s103
      %p110 = scmp.eq.s32.totalorder %s18, 1
      %p111 = por %p109, %p110
      %p112 = scmp.ne.s32.totalorder %s103, %s104
      %p113 = scmp.eq.s32.totalorder %s18, 0
      %p114 = por %p112, %p113
      %p115 = scmp.ne.s32.totalorder %s103, %s104
      %p116 = scmp.eq.s32.totalorder %s19, 1
      %p117 = por %p115, %p116
      %p119 = scmp.ne.s32.totalorder %s104, %s118
      %p120 = scmp.eq.s32.totalorder %s19, 0
      %p121 = por %p119, %p120
      %s122 = ssub.s32 %s20, %s32
      %s123 = ssub.s32 %s21, %s28
      %s124 = sor.u32 %s122, %s123
      %p125 = scmp.eq.s32.totalorder %s124, 0
      %s127 = sadd.s32 %s126, 1
      %s128 = scalar_select %p125, %s126, %s127
      %p131 = pneg %p125
      %p132 = scmp.eq.s32.totalorder %s13, 1
      %p133 = por %p131, %p132
      %p134 = scmp.ne.s32.totalorder %s126, %s129
      %p135 = scmp.eq.s32.totalorder %s13, 0
      %p136 = por %p134, %p135
      %p137 = scmp.ne.s32.totalorder %s126, %s129
      %p138 = scmp.eq.s32.totalorder %s18, 1
      %p139 = por %p137, %p138
      %p140 = scmp.ne.s32.totalorder %s129, %s130
      %p141 = scmp.eq.s32.totalorder %s18, 0
      %p142 = por %p140, %p141
      %p143 = scmp.ne.s32.totalorder %s129, %s130
      %p144 = scmp.eq.s32.totalorder %s19, 1
      %p145 = por %p143, %p144
      %p147 = scmp.ne.s32.totalorder %s130, %s146
      %p148 = scmp.eq.s32.totalorder %s19, 0
      %p149 = por %p147, %p148
      %p150 = scmp.le.s32.totalorder 1, %s13
      %p151 = scmp.lt.s32.totalorder %s13, 3
      %p152 = pnand %p150, %p151
      %p153 = pneg %p152
      // Predicated region
      $region9: #{head_forward.1} parent=5 // pred_check
        _
      $region10: #{head_forward.1} parent=5 // pred_check_branch
        %155 = sbr.rel (%p152) target = $region12
      $region11: #{head_forward.1} parent=5 // pred_region
        %s156 = ssub.s32 %s13, 1
        // Predicated region
        $region13: #{head_forward.1} parent=11 // pred_check
          %p157 = pneg %p72
        $region14: #{head_forward.1} parent=11 // pred_check_branch
          %159 = sbr.rel (%p157) target = $region16
        $region15: #{head_forward.1} parent=11 // pred_region
          _
        $region16: #{head_forward.1} parent=11 // pred_fallthru
          _
        // Predicated region
        $region17: #{head_forward.1} parent=11 // pred_check
          %p160 = pneg %p93
        $region18: #{head_forward.1} parent=11 // pred_check_branch
          %162 = sbr.rel (%p160) target = $region20
        $region19: #{head_forward.1} parent=11 // pred_region
          _
        $region20: #{head_forward.1} parent=11 // pred_fallthru
          _
        // Predicated region
        $region21: #{head_forward.1} parent=11 // pred_check
          %p163 = pneg %p114
        $region22: #{head_forward.1} parent=11 // pred_check_branch
          %165 = sbr.rel (%p163) target = $region24
        $region23: #{head_forward.1} parent=11 // pred_region
          _
        $region24: #{head_forward.1} parent=11 // pred_fallthru
          _
      $region12: #{head_forward.1} parent=5 // pred_fallthru
        _
      %p166 = scmp.lt.s32.totalorder %s13, 2
      // Predicated region
      $region25: #{head_forward.1} parent=5 // pred_check
        %p167 = pneg %p166
      $region26: #{head_forward.1} parent=5 // pred_check_branch
        %169 = sbr.rel (%p167) target = $region28
      $region27: #{head_forward.1} parent=5 // pred_region
        // Predicated region
        $region29: #{head_forward.1} parent=27 // pred_check
          %p170 = pneg %p45
        $region30: #{head_forward.1} parent=27 // pred_check_branch
          %172 = sbr.rel (%p170) target = $region32
        $region31: #{head_forward.1} parent=27 // pred_region
          %p173 = scmp.lt.s32.totalorder %s20, 1
          %s174 = scalar_select %p173, %s20, 1
          %s175 = smul.addr %s174, 8
          %s176 = scalar_lea.vmem %s0, %s175
        $region32: #{head_forward.1} parent=27 // pred_fallthru
          _
      $region28: #{head_forward.1} parent=5 // pred_fallthru
        _
      %p177 = scmp.le.s32.totalorder 1, %s13
      %p178 = scmp.lt.s32.totalorder %s13, 3
      %p179 = pnand %p177, %p178
      %p180 = pneg %p179
      // Predicated region
      $region33: #{head_forward.1} parent=5 // pred_check
        _
      $region34: #{head_forward.1} parent=5 // pred_check_branch
        %182 = sbr.rel (%p179) target = $region36
      $region35: #{head_forward.1} parent=5 // pred_region
        %s183 = ssub.s32 %s13, 1
        %p184 = scmp.lt.s32.totalorder %s22, 1
        %s185 = scalar_select %p184, %s22, 1
        %s186 = smul.addr %s185, 8
        %s187 = scalar_lea.vmem %s0, %s186
        %p188 = pneg %p51
        %p189 = pneg %p48
        %p190 = pneg %p72
        %p191 = pneg %p69
        %p192 = pneg %p93
        %p193 = pneg %p90
        %p194 = pneg %p114
        %p195 = pneg %p111
        %p196 = pneg %p142
        %p197 = pneg %p139
        %s198 = sand.u32 %s129, 1
        %s199 = scalar_lea.sflag [#allocation8], %s198
        %s200 = sand.u32 %s129, 1
        %s201 = smul.addr %s200, 8
        %s202 = scalar_lea.vmem [#allocation7], %s201
        %p203 = scmp.lt.s32.totalorder %s22, 1
        %s204 = scalar_select %p203, %s22, 1
        %s205 = smul.addr %s204, 8
        %s206 = scalar_lea.vmem %s0, %s205
        %p207 = scmp.eq.s32.totalorder %s23, 0
        // Predicated region
        $region37: #{head_forward.1} parent=35 // pred_check
          %p208 = pneg %p207
        $region38: #{head_forward.1} parent=35 // pred_check_branch
          %210 = sbr.rel (%p208) target = $region40
        $region39: #{head_forward.1} parent=35 // pred_region
          %v211 = vld [vmem:[%s206] sm:$0xff]
          %v212 = vld [vmem:[%s2] sm:$0xff]
          %v213 = vld [vmem:[%s2 + $0x8] sm:$0xff]
          %v214 = vld [vmem:[%s2 + $0x10] sm:$0xff]
          %v215 = vld [vmem:[%s2 + $0x18] sm:$0xff]
          %vm216 = vcmask 261120
          %v218 = vsel %vm216, %v211, 0
          %220 = vmatprep.subr.mxu0 0.0
          %221 = vmatpush1.msra.mxu0 %v212
          %222 = vmatprep.subr.mxu0 0.0
          %223 = vmatpush1.msra.mxu0 %v213
          %224 = vmatprep.subr.mxu0 0.0
          %225 = vmatpush1.msra.mxu0 %v214
          %226 = vmatprep.subr.mxu0 0.0
          %227 = vmatpush1.msra.mxu0 %v215
          %228 = vmatprep.subr.mxu0 0.0
          %229 = vmatpush1.msra.mxu0 0.0
          %230 = vmatprep.subr.mxu0 0.0
          %231 = vmatpush1.msra.mxu0 0.0
          %232 = vmatprep.subr.mxu0 0.0
          %233 = vmatpush1.msra.mxu0 0.0
          %234 = vmatprep.subr.mxu0 0.0
          %235 = vmatpush1.msra.mxu0 0.0
          %236 = vmatprep.subr.mxu0 0.0
          %237 = vmatpush1.msra.mxu0 0.0
          %238 = vmatprep.subr.mxu0 0.0
          %239 = vmatpush1.msra.mxu0 0.0
          %240 = vmatprep.subr.mxu0 0.0
          %241 = vmatpush1.msra.mxu0 0.0
          %242 = vmatprep.subr.mxu0 0.0
          %243 = vmatpush1.msra.mxu0 0.0
          %244 = vmatprep.subr.mxu0 0.0
          %245 = vmatpush1.msra.mxu0 0.0
          %246 = vmatprep.subr.mxu0 0.0
          %247 = vmatpush1.msra.mxu0 0.0
          %248 = vmatprep.subr.mxu0 0.0
          %249 = vmatpush1.msra.mxu0 0.0
          %250 = vmatprep.subr.mxu0 0.0
          %251 = vmatpush1.msra.mxu0 0.0
          %252 = vmatprep.subr.mxu0 0.0
          %253 = vmatpush1.msra.mxu0 0.0
          %254 = vmatprep.subr.mxu0 0.0
          %255 = vmatpush1.msra.mxu0 0.0
          %256 = vmatprep.subr.mxu0 0.0
          %257 = vmatpush1.msra.mxu0 0.0
          %258 = vmatprep.subr.mxu0 0.0
          %259 = vmatpush1.msra.mxu0 0.0
          %260 = vmatprep.subr.mxu0 0.0
          %261 = vmatpush1.msra.mxu0 0.0
          %262 = vmatprep.subr.mxu0 0.0
          %263 = vmatpush1.msra.mxu0 0.0
          %264 = vmatprep.subr.mxu0 0.0
          %265 = vmatpush1.msra.mxu0 0.0
          %266 = vmatprep.subr.mxu0 0.0
          %267 = vmatpush1.msra.mxu0 0.0
          %268 = vmatprep.subr.mxu0 0.0
          %269 = vmatpush1.msra.mxu0 0.0
          %270 = vmatprep.subr.mxu0 0.0
          %271 = vmatpush1.msra.mxu0 0.0
          %272 = vmatprep.subr.mxu0 0.0
          %273 = vmatpush1.msra.mxu0 0.0
          %274 = vmatprep.subr.mxu0 0.0
          %275 = vmatpush1.msra.mxu0 0.0
          %276 = vmatprep.subr.mxu0 0.0
          %277 = vmatpush1.msra.mxu0 0.0
          %278 = vmatprep.subr.mxu0 0.0
          %279 = vmatpush1.msra.mxu0 0.0
          %280 = vmatprep.subr.mxu0 0.0
          %281 = vmatpush1.msra.mxu0 0.0
          %282 = vmatprep.subr.mxu0 0.0
          %283 = vmatpush1.msra.mxu0 0.0
          %284 = vmatprep.mubr.f32.mxu0 0.0
          %285 = vmatmul.mubr.f32.gmra.mrb[0].mxu0 %v218
          %v286 = vpop.f32.mrb[0].mxu0
          %v287 = vadd.f32 0.0, %v286
          %v288 = vpop.f32.mrb[0].mxu0
          %289 = vdwg.mxu0
          %vm290 = vcmask 130048
          %291 = vst.msk [vmem:[#allocation2] sm:$0xff] %vm290, %v287
          %v292 = vld [vmem:[%s3] sm:$0xff]
          %v293 = vld [vmem:[%s3 + $0x8] sm:$0xff]
          %v294 = vld [vmem:[%s3 + $0x10] sm:$0xff]
          %v295 = vld [vmem:[%s3 + $0x18] sm:$0xff]
          %296 = vmatprep.subr.mxu0 0.0
          %297 = vmatpush1.msra.mxu0 %v292
          %298 = vmatprep.subr.mxu0 0.0
          %299 = vmatpush1.msra.mxu0 %v293
          %300 = vmatprep.subr.mxu0 0.0
          %301 = vmatpush1.msra.mxu0 %v294
          %302 = vmatprep.subr.mxu0 0.0
          %303 = vmatpush1.msra.mxu0 %v295
          %304 = vmatprep.subr.mxu0 0.0
          %305 = vmatpush1.msra.mxu0 0.0
          %306 = vmatprep.subr.mxu0 0.0
          %307 = vmatpush1.msra.mxu0 0.0
          %308 = vmatprep.subr.mxu0 0.0
          %309 = vmatpush1.msra.mxu0 0.0
          %310 = vmatprep.subr.mxu0 0.0
          %311 = vmatpush1.msra.mxu0 0.0
          %312 = vmatprep.subr.mxu0 0.0
          %313 = vmatpush1.msra.mxu0 0.0
          %314 = vmatprep.subr.mxu0 0.0
          %315 = vmatpush1.msra.mxu0 0.0
          %316 = vmatprep.subr.mxu0 0.0
          %317 = vmatpush1.msra.mxu0 0.0
          %318 = vmatprep.subr.mxu0 0.0
          %319 = vmatpush1.msra.mxu0 0.0
          %320 = vmatprep.subr.mxu0 0.0
          %321 = vmatpush1.msra.mxu0 0.0
          %322 = vmatprep.subr.mxu0 0.0
          %323 = vmatpush1.msra.mxu0 0.0
          %324 = vmatprep.subr.mxu0 0.0
          %325 = vmatpush1.msra.mxu0 0.0
          %326 = vmatprep.subr.mxu0 0.0
          %327 = vmatpush1.msra.mxu0 0.0
          %328 = vmatprep.subr.mxu0 0.0
          %329 = vmatpush1.msra.mxu0 0.0
          %330 = vmatprep.subr.mxu0 0.0
          %331 = vmatpush1.msra.mxu0 0.0
          %332 = vmatprep.subr.mxu0 0.0
          %333 = vmatpush1.msra.mxu0 0.0
          %334 = vmatprep.subr.mxu0 0.0
          %335 = vmatpush1.msra.mxu0 0.0
          %336 = vmatprep.subr.mxu0 0.0
          %337 = vmatpush1.msra.mxu0 0.0
          %338 = vmatprep.subr.mxu0 0.0
          %339 = vmatpush1.msra.mxu0 0.0
          %340 = vmatprep.subr.mxu0 0.0
          %341 = vmatpush1.msra.mxu0 0.0
          %342 = vmatprep.subr.mxu0 0.0
          %343 = vmatpush1.msra.mxu0 0.0
          %344 = vmatprep.subr.mxu0 0.0
          %345 = vmatpush1.msra.mxu0 0.0
          %346 = vmatprep.subr.mxu0 0.0
          %347 = vmatpush1.msra.mxu0 0.0
          %348 = vmatprep.subr.mxu0 0.0
          %349 = vmatpush1.msra.mxu0 0.0
          %350 = vmatprep.subr.mxu0 0.0
          %351 = vmatpush1.msra.mxu0 0.0
          %352 = vmatprep.subr.mxu0 0.0
          %353 = vmatpush1.msra.mxu0 0.0
          %354 = vmatprep.subr.mxu0 0.0
          %355 = vmatpush1.msra.mxu0 0.0
          %356 = vmatprep.subr.mxu0 0.0
          %357 = vmatpush1.msra.mxu0 0.0
          %358 = vmatprep.subr.mxu0 0.0
          %359 = vmatpush1.msra.mxu0 0.0
          %360 = vmatprep.mubr.f32.mxu0 0.0
          %361 = vmatmul.mubr.f32.gmra.mrb[0].mxu0 %v218
          %v362 = vpop.f32.mrb[0].mxu0
          %v363 = vadd.f32 0.0, %v362
          %v364 = vpop.f32.mrb[0].mxu0
          %365 = vdwg.mxu0
          %366 = vst.msk [vmem:[#allocation3] sm:$0xff] %vm290, %v363
        $region40: #{head_forward.1} parent=35 // pred_fallthru
          _
        %s367 = smul.u32 %s23, 8
        %s368 = scalar_lea.vmem %s206, %s367
        %v369 = vld [vmem:[%s368] sm:$0xff]
        %v370 = vld [vmem:[%s1] sm:$0xff]
        %v371 = vld [vmem:[%s1 + $0x8] sm:$0xff]
        %v372 = vld [vmem:[%s1 + $0x10] sm:$0xff]
        %v373 = vld [vmem:[%s1 + $0x18] sm:$0xff]
        %vm374 = vcmask 261120
        %v376 = vsel %vm374, %v369, 0
        %378 = vmatprep.subr.mxu0 0.0
        %379 = vmatpush1.msra.mxu0 %v370
        %380 = vmatprep.subr.mxu0 0.0
        %381 = vmatpush1.msra.mxu0 %v371
        %382 = vmatprep.subr.mxu0 0.0
        %383 = vmatpush1.msra.mxu0 %v372
        %384 = vmatprep.subr.mxu0 0.0
        %385 = vmatpush1.msra.mxu0 %v373
        %386 = vmatprep.subr.mxu0 0.0
        %387 = vmatpush1.msra.mxu0 0.0
        %388 = vmatprep.subr.mxu0 0.0
        %389 = vmatpush1.msra.mxu0 0.0
        %390 = vmatprep.subr.mxu0 0.0
        %391 = vmatpush1.msra.mxu0 0.0
        %392 = vmatprep.subr.mxu0 0.0
        %393 = vmatpush1.msra.mxu0 0.0
        %394 = vmatprep.subr.mxu0 0.0
        %395 = vmatpush1.msra.mxu0 0.0
        %396 = vmatprep.subr.mxu0 0.0
        %397 = vmatpush1.msra.mxu0 0.0
        %398 = vmatprep.subr.mxu0 0.0
        %399 = vmatpush1.msra.mxu0 0.0
        %400 = vmatprep.subr.mxu0 0.0
        %401 = vmatpush1.msra.mxu0 0.0
        %402 = vmatprep.subr.mxu0 0.0
        %403 = vmatpush1.msra.mxu0 0.0
        %404 = vmatprep.subr.mxu0 0.0
        %405 = vmatpush1.msra.mxu0 0.0
        %406 = vmatprep.subr.mxu0 0.0
        %407 = vmatpush1.msra.mxu0 0.0
        %408 = vmatprep.subr.mxu0 0.0
        %409 = vmatpush1.msra.mxu0 0.0
        %410 = vmatprep.subr.mxu0 0.0
        %411 = vmatpush1.msra.mxu0 0.0
        %412 = vmatprep.subr.mxu0 0.0
        %413 = vmatpush1.msra.mxu0 0.0
        %414 = vmatprep.subr.mxu0 0.0
        %415 = vmatpush1.msra.mxu0 0.0
        %416 = vmatprep.subr.mxu0 0.0
        %417 = vmatpush1.msra.mxu0 0.0
        %418 = vmatprep.subr.mxu0 0.0
        %419 = vmatpush1.msra.mxu0 0.0
        %420 = vmatprep.subr.mxu0 0.0
        %421 = vmatpush1.msra.mxu0 0.0
        %422 = vmatprep.subr.mxu0 0.0
        %423 = vmatpush1.msra.mxu0 0.0
        %424 = vmatprep.subr.mxu0 0.0
        %425 = vmatpush1.msra.mxu0 0.0
        %426 = vmatprep.subr.mxu0 0.0
        %427 = vmatpush1.msra.mxu0 0.0
        %428 = vmatprep.subr.mxu0 0.0
        %429 = vmatpush1.msra.mxu0 0.0
        %430 = vmatprep.subr.mxu0 0.0
        %431 = vmatpush1.msra.mxu0 0.0
        %432 = vmatprep.subr.mxu0 0.0
        %433 = vmatpush1.msra.mxu0 0.0
        %434 = vmatprep.subr.mxu0 0.0
        %435 = vmatpush1.msra.mxu0 0.0
        %436 = vmatprep.subr.mxu0 0.0
        %437 = vmatpush1.msra.mxu0 0.0
        %438 = vmatprep.subr.mxu0 0.0
        %439 = vmatpush1.msra.mxu0 0.0
        %440 = vmatprep.subr.mxu0 0.0
        %441 = vmatpush1.msra.mxu0 0.0
        %442 = vmatprep.mubr.f32.mxu0 0.0
        %443 = vmatmul.mubr.f32.gmra.mrb[0].mxu0 %v376
        %v444 = vpop.f32.mrb[0].mxu0
        %v445 = vadd.f32 0.0, %v444
        %v446 = vpop.f32.mrb[0].mxu0
        %447 = vdwg.mxu0
        %v448 = vmul.f32 %v445, 0.25
        %vm449 = vcmask 7168
        %450 = vst.msk [vmem:[#allocation4] sm:$0xff] %vm449, -inf
        %451 = vst.msk [vmem:[#allocation5] sm:$0xff] %vm449, 0.0
        %vm452 = vcmask 130048
        %453 = vst.msk [vmem:[#allocation6] sm:$0xff] %vm452, 0.0
        %s454 = sadd.s32 %s23, 1
        // While loop
        $region41: #{head_forward.1} parent=35 // loop_pre_header
          _
        $region42: #{head_forward.1} parent=35 // loop_header
          %s456 = sphi 0, %s458
          %p457 = scmp.ge.s32.totalorder %s456, %s454
        $region43: #{head_forward.1} parent=35 // loop_header_branch
          %460 = sbr.rel (%p457) target = $region47
        $region44: #{head_forward.1} parent=35 // loop_body
          %s461 = smul.u32 %s456, 8
          %s462 = scalar_lea.vmem [#allocation2], %s461
          %v463 = vld [vmem:[%s462] sm:$0xff]
          %s464 = scalar_lea.vmem [#allocation3], %s461
          %v465 = vld [vmem:[%s464] sm:$0xff]
          %v467 = vsel %vm452, %v448, 0
          %v470 = vsel %vm452, %v463, 0
          %472 = vmatprep.subr.mxu0 0.0
          %473 = vmatpush1.xpose.msra.mxu0 %v470
          %474 = vmatprep.subr.mxu0 0.0
          %475 = vmatpush1.xpose.msra.mxu0 0.0
          %476 = vmatprep.subr.mxu0 0.0
          %477 = vmatpush1.xpose.msra.mxu0 0.0
          %478 = vmatprep.subr.mxu0 0.0
          %479 = vmatpush1.xpose.msra.mxu0 0.0
          %480 = vmatprep.subr.mxu0 0.0
          %481 = vmatpush1.xpose.msra.mxu0 0.0
          %482 = vmatprep.subr.mxu0 0.0
          %483 = vmatpush1.xpose.msra.mxu0 0.0
          %484 = vmatprep.subr.mxu0 0.0
          %485 = vmatpush1.xpose.msra.mxu0 0.0
          %486 = vmatprep.subr.mxu0 0.0
          %487 = vmatpush1.xpose.msra.mxu0 0.0
          %488 = vmatprep.subr.mxu0 0.0
          %489 = vmatpush1.xpose.msra.mxu0 0.0
          %490 = vmatprep.subr.mxu0 0.0
          %491 = vmatpush1.xpose.msra.mxu0 0.0
          %492 = vmatprep.subr.mxu0 0.0
          %493 = vmatpush1.xpose.msra.mxu0 0.0
          %494 = vmatprep.subr.mxu0 0.0
          %495 = vmatpush1.xpose.msra.mxu0 0.0
          %496 = vmatprep.subr.mxu0 0.0
          %497 = vmatpush1.xpose.msra.mxu0 0.0
          %498 = vmatprep.subr.mxu0 0.0
          %499 = vmatpush1.xpose.msra.mxu0 0.0
          %500 = vmatprep.subr.mxu0 0.0
          %501 = vmatpush1.xpose.msra.mxu0 0.0
          %502 = vmatprep.subr.mxu0 0.0
          %503 = vmatpush1.xpose.msra.mxu0 0.0
          %504 = vmatprep.subr.mxu0 0.0
          %505 = vmatpush1.xpose.msra.mxu0 0.0
          %506 = vmatprep.subr.mxu0 0.0
          %507 = vmatpush1.xpose.msra.mxu0 0.0
          %508 = vmatprep.subr.mxu0 0.0
          %509 = vmatpush1.xpose.msra.mxu0 0.0
          %510 = vmatprep.subr.mxu0 0.0
          %511 = vmatpush1.xpose.msra.mxu0 0.0
          %512 = vmatprep.subr.mxu0 0.0
          %513 = vmatpush1.xpose.msra.mxu0 0.0
          %514 = vmatprep.subr.mxu0 0.0
          %515 = vmatpush1.xpose.msra.mxu0 0.0
          %516 = vmatprep.subr.mxu0 0.0
          %517 = vmatpush1.xpose.msra.mxu0 0.0
          %518 = vmatprep.subr.mxu0 0.0
          %519 = vmatpush1.xpose.msra.mxu0 0.0
          %520 = vmatprep.subr.mxu0 0.0
          %521 = vmatpush1.xpose.msra.mxu0 0.0
          %522 = vmatprep.subr.mxu0 0.0
          %523 = vmatpush1.xpose.msra.mxu0 0.0
          %524 = vmatprep.subr.mxu0 0.0
          %525 = vmatpush1.xpose.msra.mxu0 0.0
          %526 = vmatprep.subr.mxu0 0.0
          %527 = vmatpush1.xpose.msra.mxu0 0.0
          %528 = vmatprep.subr.mxu0 0.0
          %529 = vmatpush1.xpose.msra.mxu0 0.0
          %530 = vmatprep.subr.mxu0 0.0
          %531 = vmatpush1.xpose.msra.mxu0 0.0
          %532 = vmatprep.subr.mxu0 0.0
          %533 = vmatpush1.xpose.msra.mxu0 0.0
          %534 = vmatprep.subr.mxu0 0.0
          %535 = vmatpush1.xpose.msra.mxu0 0.0
          %536 = vmatprep.mubr.f32.mxu0 0.0
          %537 = vmatmul.mubr.f32.gmra.mrb[0].mxu0 %v467
          %v538 = vpop.f32.mrb[0].mxu0
          %v539 = vadd.f32 0.0, %v538
          %v540 = vpop.f32.mrb[0].mxu0
          %541 = vdwg.mxu0
          %v542 = vlaneseq
          %v543 = vshrl.u32 %v542, 7
          %v544 = vstv %s367
          %v545 = vadd.s32 %v544, %v543
          %v546 = vlaneseq
          %v547 = vand.u32 %v546, 127
          %v548 = vstv %s461
          %v549 = vadd.s32 %v548, %v547
          %vm550 = vcmp.le.s32.totalorder %v549, %v545
          %vm551 = vcmp.lt.s32.totalorder %v549, 8
          %vm552 = vmand %vm550, %vm551
          %v553 = vsel %vm552, %v539, -inf
          %v554 = vld [vmem:[#allocation4] sm:$0xff]
          %vm555 = vcmask 64512
          %v556 = vsel %vm555, %v553, -inf
          %557 = vmax.xlane.f32.xlu0 %v556
          %v558 = vpop.xlane.xlu0 %557
          %v559 = vmax.f32 %v554, %v558
          %v560 = vsub.f32 %v554, %v559
          %v561 = vmul.f32 %v560, 1.442695
          %v562 = vpow.pop %v561
          %564 = vset.pattern.permute.xlu0 0
          %565 = vperm.xlu0 %564, %v559
          %v566 = vpop.permute.xlu0 %565
          %v568 = vsub.f32 %v553, %v566
          %v569 = vmul.f32 %v568, 1.442695
          %v570 = vpow.pop %v569
          %v571 = vld [vmem:[#allocation5] sm:$0xff]
          %v572 = vmul.f32 %v562, %v571
          %v573 = vsel %vm555, %v570, 0.0
          %574 = vadd.xlane.f32.xlu0 %v573
          %v575 = vpop.xlane.xlu0 %574
          %v576 = vadd.f32 %v572, %v575
          %577 = vst.msk [vmem:[#allocation5] sm:$0xff] %vm449, %v576
          %v578 = vld [vmem:[#allocation6] sm:$0xff]
          %580 = vset.pattern.permute.xlu0 0
          %581 = vperm.xlu0 %580, %v562
          %v582 = vpop.permute.xlu0 %581
          %v584 = vmul.f32 %v582, %v578
          %v586 = vsel %vm555, %v570, 0
          %588 = vmatprep.subr.mxu0 0.0
          %589 = vmatpush1.msra.mxu0 %v465
          %590 = vmatprep.subr.mxu0 0.0
          %591 = vmatpush1.msra.mxu0 0.0
          %592 = vmatprep.subr.mxu0 0.0
          %593 = vmatpush1.msra.mxu0 0.0
          %594 = vmatprep.subr.mxu0 0.0
          %595 = vmatpush1.msra.mxu0 0.0
          %596 = vmatprep.subr.mxu0 0.0
          %597 = vmatpush1.msra.mxu0 0.0
          %598 = vmatprep.subr.mxu0 0.0
          %599 = vmatpush1.msra.mxu0 0.0
          %600 = vmatprep.subr.mxu0 0.0
          %601 = vmatpush1.msra.mxu0 0.0
          %602 = vmatprep.subr.mxu0 0.0
          %603 = vmatpush1.msra.mxu0 0.0
          %604 = vmatprep.subr.mxu0 0.0
          %605 = vmatpush1.msra.mxu0 0.0
          %606 = vmatprep.subr.mxu0 0.0
          %607 = vmatpush1.msra.mxu0 0.0
          %608 = vmatprep.subr.mxu0 0.0
          %609 = vmatpush1.msra.mxu0 0.0
          %610 = vmatprep.subr.mxu0 0.0
          %611 = vmatpush1.msra.mxu0 0.0
          %612 = vmatprep.subr.mxu0 0.0
          %613 = vmatpush1.msra.mxu0 0.0
          %614 = vmatprep.subr.mxu0 0.0
          %615 = vmatpush1.msra.mxu0 0.0
          %616 = vmatprep.subr.mxu0 0.0
          %617 = vmatpush1.msra.mxu0 0.0
          %618 = vmatprep.subr.mxu0 0.0
          %619 = vmatpush1.msra.mxu0 0.0
          %620 = vmatprep.subr.mxu0 0.0
          %621 = vmatpush1.msra.mxu0 0.0
          %622 = vmatprep.subr.mxu0 0.0
          %623 = vmatpush1.msra.mxu0 0.0
          %624 = vmatprep.subr.mxu0 0.0
          %625 = vmatpush1.msra.mxu0 0.0
          %626 = vmatprep.subr.mxu0 0.0
          %627 = vmatpush1.msra.mxu0 0.0
          %628 = vmatprep.subr.mxu0 0.0
          %629 = vmatpush1.msra.mxu0 0.0
          %630 = vmatprep.subr.mxu0 0.0
          %631 = vmatpush1.msra.mxu0 0.0
          %632 = vmatprep.subr.mxu0 0.0
          %633 = vmatpush1.msra.mxu0 0.0
          %634 = vmatprep.subr.mxu0 0.0
          %635 = vmatpush1.msra.mxu0 0.0
          %636 = vmatprep.subr.mxu0 0.0
          %637 = vmatpush1.msra.mxu0 0.0
          %638 = vmatprep.subr.mxu0 0.0
          %639 = vmatpush1.msra.mxu0 0.0
          %640 = vmatprep.subr.mxu0 0.0
          %641 = vmatpush1.msra.mxu0 0.0
          %642 = vmatprep.subr.mxu0 0.0
          %643 = vmatpush1.msra.mxu0 0.0
          %644 = vmatprep.subr.mxu0 0.0
          %645 = vmatpush1.msra.mxu0 0.0
          %646 = vmatprep.subr.mxu0 0.0
          %647 = vmatpush1.msra.mxu0 0.0
          %648 = vmatprep.subr.mxu0 0.0
          %649 = vmatpush1.msra.mxu0 0.0
          %650 = vmatprep.subr.mxu0 0.0
          %651 = vmatpush1.msra.mxu0 0.0
          %652 = vmatprep.mubr.f32.mxu0 0.0
          %653 = vmatmul.mubr.f32.gmra.mrb[0].mxu0 %v586
          %v654 = vpop.f32.mrb[0].mxu0
          %v655 = vadd.f32 0.0, %v654
          %v656 = vpop.f32.mrb[0].mxu0
          %657 = vdwg.mxu0
          %v658 = vadd.f32 %v584, %v655
          %659 = vst.msk [vmem:[#allocation6] sm:$0xff] %vm452, %v658
          %660 = vst.msk [vmem:[#allocation4] sm:$0xff] %vm449, %v559
        $region45: #{head_forward.1} parent=35 // loop_footer
          %s458 = sadd.s32 %s456, 1
        $region46: #{head_forward.1} parent=35 // loop_footer_branch
          %455 = sbr.rel target = $region42
        $region47: #{head_forward.1} parent=35 // loop_exit
          _
        %v661 = vld [vmem:[#allocation6] sm:$0xff]
        %v662 = vld [vmem:[#allocation5] sm:$0xff]
        %v663 = vrcp.pop %v662
        %665 = vset.pattern.permute.xlu0 0
        %666 = vperm.xlu0 %665, %v663
        %v667 = vpop.permute.xlu0 %666
        %v669 = vmul.f32 %v661, %v667
        %670 = vst.msk [vmem:[%s202] sm:$0xff] %vm452, %v669
        %s671 = sand.u32 %s129, 1
        %s672 = scalar_lea.sflag [#allocation8], %s671
        %s673 = sand.u32 %s129, 1
        %s674 = smul.addr %s673, 8
        %s675 = scalar_lea.vmem [#allocation7], %s674
        // Predicated region
        $region48: #{head_forward.1} parent=35 // pred_check
          %p676 = pneg %p139
        $region49: #{head_forward.1} parent=35 // pred_check_branch
          %678 = sbr.rel (%p676) target = $region51
        $region50: #{head_forward.1} parent=35 // pred_region
          %s680 = ssub.s32 128, 128
          %681 = vsyncadd %s672, %s680
          %s682 = sadd.s32 %s23, %s22
          %s683 = smul.addr %s682, 128
          %s684 = scalar_lea.hbm %s4, %s683
          %s686 = sshll.u32 %s675, 4
          %s687 = int_to_ptr.vmem [resolvable:$true] %s686
          %689 = dma.vmem_to_hbm [thread:$0]  %s687, 128, %s684, %s672
        $region51: #{head_forward.1} parent=35 // pred_fallthru
          _
      $region36: #{head_forward.1} parent=5 // pred_fallthru
        _
      %p690 = scmp.le.s32.totalorder 2, %s13
      // Predicated region
      $region52: #{head_forward.1} parent=5 // pred_check
        %p691 = pneg %p690
      $region53: #{head_forward.1} parent=5 // pred_check_branch
        %693 = sbr.rel (%p691) target = $region55
      $region54: #{head_forward.1} parent=5 // pred_region
        %s694 = ssub.s32 %s13, 2
        // Predicated region
        $region56: #{head_forward.1} parent=54 // pred_check
          %p695 = pneg %p145
        $region57: #{head_forward.1} parent=54 // pred_check_branch
          %697 = sbr.rel (%p695) target = $region59
        $region58: #{head_forward.1} parent=54 // pred_region
          %s698 = sand.u32 %s130, 1
          %s699 = scalar_lea.sflag [#allocation8], %s698
          %s700 = sand.u32 %s130, 1
          %s701 = smul.addr %s700, 8
          %s702 = scalar_lea.vmem [#allocation7], %s701
          %703 = dma.done %s699, 128
        $region59: #{head_forward.1} parent=54 // pred_fallthru
          _
      $region55: #{head_forward.1} parent=5 // pred_fallthru
        _
    $region6: #{head_forward.1} parent=1 // loop_footer
      %s17 = sadd.s32 1, %s13
    $region7: #{head_forward.1} parent=1 // loop_footer_branch
      %12 = sbr.rel target = $region3
    $region8: #{head_forward.1} parent=1 // loop_exit
      _
    %704 = vsyncpa [#allocation8], 1
    %s705 = scalar_lea.sflag [#allocation8], 1
    %706 = vsyncpa %s705, 1

</llo_original>
